<compile_context>
chip_gen: v5e
topology: v5e:2x2
jax: 0.10.0
libtpu: 0.0.40
codegen_flags: <defaults>
</compile_context>

<pallas_src>
import jax
import jax.numpy as jnp
from jax import lax
from jax.experimental import pallas as pl
from jax.experimental.pallas import tpu as pltpu


def bilstm_kernel(x_ref, wih_ref, whh_ref, b_ref, out_ref):
    """Bidirectional single-layer LSTM, both directions fused in one program.

    x_ref   : (T*2B, 2E) bf16  block-diagonal (over direction) time-major input
                               row block 2t   = x[t]     in lanes 0:E
                               row block 2t+1 = x[T-1-t] in lanes E:2E
    wih_ref : (2E, 4H)   bf16  [W_ih_f^T ; W_ih_b^T] row-stacked, gates i|f|o|g
    whh_ref : (H, 8H)    bf16  [W_hh_f^T | W_hh_b^T] col-stacked, gates i|f|o|g
    b_ref   : (2B, 4H)   f32   rows 0:B = b_f (b_ih+b_hh), rows B:2B = b_b
    out_ref : (B, 2H)    f32   [final fwd h | final bwd h] lane-concatenated
    """
    twoB, H4 = b_ref.shape
    B = twoB // 2
    H = H4 // 4
    T = x_ref.shape[0] // twoB

    # ---- prologue: ONE bf16 MXU matmul projects the whole sequence for BOTH
    # directions (input was block-diagonalized over 2E in the wrapper), f32 acc.
    gx = jnp.dot(x_ref[...], wih_ref[...],
                 preferred_element_type=jnp.float32)            # (T*2B, 4H)

    b = b_ref[...]                                              # (2B, 4H) f32
    whh = whh_ref[...]                                          # (H, 8H) bf16
    # rows 0:B are the forward direction, rows B:2B the backward direction
    is_fwd = lax.broadcasted_iota(jnp.int32, (twoB, 1), 0) < B

    h = jnp.zeros((twoB, H), jnp.float32)
    c = jnp.zeros((twoB, H), jnp.float32)

    # Fully unrolled recurrence (T small & static here).
    # TODO(synk): for long sequences, park gx in VMEM + lax.fori_loop with
    # pl.ds slices (bounded live ranges), tile T as a grid axis (v7x 64 MiB
    # VMEM), and optionally split directions across v7x's two TensorCores.
    for t in range(T):
        # Off the serial path: gx slice + bias add only depend on the prologue,
        # so the scheduler can precompute them under the recurrent dot latency.
        gates = gx[t * twoB:(t + 1) * twoB, :] + b              # (2B, 4H)
        if t > 0:  # h == 0 at t == 0 -> skip the recurrent dot
            # Both directions in ONE MXU push; pick the relevant 4H half per
            # row with a register-resident select (no VMEM scratch / masked
            # stores on the per-step critical path).
            rec = jnp.dot(h.astype(jnp.bfloat16), whh,
                          preferred_element_type=jnp.float32)   # (2B, 8H)
            gates = gates + jnp.where(is_fwd, rec[:, :H4], rec[:, H4:])

        # Gate order was repacked to [i | f | o | g]: sigmoid over exactly the
        # first 3H lanes, tanh over exactly the last H lanes (minimal EUP).
        s = jax.nn.sigmoid(gates[:, :3 * H])
        g = jnp.tanh(gates[:, 3 * H:])
        i_g = s[:, 0:H]
        f_g = s[:, H:2 * H]
        o_g = s[:, 2 * H:3 * H]
        c = f_g * c + i_g * g
        h = o_g * jnp.tanh(c)

    # Lane-dense epilogue: (B, 2H) == torch.cat((h_n[-2], h_n[-1]), dim=1)
    out_ref[:, 0:H] = h[0:B, :]
    out_ref[:, H:2 * H] = h[B:2 * B, :]


def _reorder_gates_ifgo_to_ifog(w, H, axis=0):
    """PyTorch LSTM gate blocks [i|f|g|o] -> kernel order [i|f|o|g]."""
    i_f = lax.slice_in_dim(w, 0, 2 * H, axis=axis)
    g = lax.slice_in_dim(w, 2 * H, 3 * H, axis=axis)
    o = lax.slice_in_dim(w, 3 * H, 4 * H, axis=axis)
    return jnp.concatenate([i_f, o, g], axis=axis)


def prepare_lstm_params(params):
    """One-time weight repack: gate reorder, transpose, direction packing,
    bias folding (b_ih + b_hh), bf16 cast. Nothing here runs per forward."""
    H = params['whh_f'].shape[1]
    ro = lambda w: _reorder_gates_ifgo_to_ifog(w, H, axis=0)

    # input weights row-stacked over 2E -> (2E, 4H), matching block-diag x
    wih_packed = jnp.concatenate(
        [ro(params['wih_f']).T, ro(params['wih_b']).T],
        axis=0).astype(jnp.bfloat16)                            # (2E, 4H)
    # recurrent weights column-stacked over 8H -> (H, 8H)
    whh_packed = jnp.concatenate(
        [ro(params['whh_f']).T, ro(params['whh_b']).T],
        axis=1).astype(jnp.bfloat16)                            # (H, 8H)
    b_f = ro(params['bih_f'] + params['bhh_f']).astype(jnp.float32)  # (4H,)
    b_b = ro(params['bih_b'] + params['bhh_b']).astype(jnp.float32)  # (4H,)
    return {'wih_packed': wih_packed, 'whh_packed': whh_packed,
            'b_f': b_f, 'b_b': b_b}


@jax.jit
def bilstm_forward(x_emb, prep):
    """x_emb: (B, T, E) float32 embedded input.
    Returns (B, 2H) float32 == torch.cat((h_n[-2], h_n[-1]), dim=1)."""
    B, T, E = x_emb.shape
    H = prep['whh_packed'].shape[0]

    # Block-diagonalize the input over the direction axis (ONCE per call,
    # outside the serial recurrence): no per-step concatenates in the kernel.
    x_tm = jnp.transpose(x_emb, (1, 0, 2))                      # (T, B, E)
    zeros = jnp.zeros_like(x_tm)
    fwd_rows = jnp.concatenate([x_tm, zeros], axis=-1)          # (T, B, 2E)
    bwd_rows = jnp.concatenate([zeros, x_tm[::-1]], axis=-1)    # (T, B, 2E)
    x_bd = jnp.concatenate([fwd_rows, bwd_rows], axis=1)        # (T, 2B, 2E)
    x_bd = x_bd.reshape(T * 2 * B, 2 * E).astype(jnp.bfloat16)

    # direction-selected bias tile (kept f32, out of the bf16 matmuls)
    b2 = jnp.concatenate([jnp.broadcast_to(prep['b_f'], (B, 4 * H)),
                          jnp.broadcast_to(prep['b_b'], (B, 4 * H))], axis=0)

    vmem = pl.BlockSpec(memory_space=pltpu.MemorySpace.VMEM)
    out = pl.pallas_call(
        bilstm_kernel,
        out_shape=jax.ShapeDtypeStruct((B, 2 * H), jnp.float32),
        in_specs=[vmem, vmem, vmem, vmem],
        out_specs=vmem,
        compiler_params=pltpu.CompilerParams(vmem_limit_bytes=32 * 1024 * 1024),
    )(x_bd, prep['wih_packed'], prep['whh_packed'], b2)

    # dropout (eval mode) == identity
    # TODO(synk): training-mode dropout (p=0.1) not modeled; eval-mode identity.
    return out


# ---------------- pure-JAX reference (for correctness check) ----------------
# Mirrors the kernel's numerics: bf16 matmul operands, f32 accumulation, f32
# bias and elementwise gate math.
def bilstm_ref(x_emb, p):
    H = p['whh_f'].shape[1]
    x_tm = jnp.transpose(x_emb, (1, 0, 2)).astype(jnp.bfloat16)

    def run(x_seq, wih, whh, bih, bhh):
        wih_t = wih.T.astype(jnp.bfloat16)     # (E, 4H)
        whh_t = whh.T.astype(jnp.bfloat16)     # (H, 4H)
        b = (bih + bhh)[None, :].astype(jnp.float32)
        B = x_seq.shape[1]

        def step(carry, x_t):
            h, c = carry
            g = (jnp.dot(x_t, wih_t, preferred_element_type=jnp.float32)
                 + jnp.dot(h.astype(jnp.bfloat16), whh_t,
                           preferred_element_type=jnp.float32)
                 + b)
            i = jax.nn.sigmoid(g[:, :H])
            f = jax.nn.sigmoid(g[:, H:2 * H])
            gg = jnp.tanh(g[:, 2 * H:3 * H])
            o = jax.nn.sigmoid(g[:, 3 * H:])
            c = f * c + i * gg
            h = o * jnp.tanh(c)
            return (h, c), None

        init = (jnp.zeros((B, H), jnp.float32), jnp.zeros((B, H), jnp.float32))
        (h, _), _ = lax.scan(step, init, x_seq)
        return h

    hf = run(x_tm, p['wih_f'], p['whh_f'], p['bih_f'], p['bhh_f'])
    hb = run(x_tm[::-1], p['wih_b'], p['whh_b'], p['bih_b'], p['bhh_b'])
    return jnp.concatenate([hf, hb], axis=1)


if __name__ == "__main__":
    # small shapes consistent with the module's forward
    B, T, VOCAB, E, H = 2, 8, 64, 16, 32

    key = jax.random.PRNGKey(0)
    k_tok, k_emb, *k_w = jax.random.split(key, 11)

    # token ids (B, T) and embedding table (vocab, E)
    token_ids = jax.random.randint(k_tok, (B, T), 0, VOCAB, dtype=jnp.int32)
    emb_table = jax.random.normal(k_emb, (VOCAB, E), dtype=jnp.float32)

    # nn.LSTM parameter init: uniform(-1/sqrt(H), 1/sqrt(H)), gate order i,f,g,o
    scale = 1.0 / jnp.sqrt(jnp.float32(H))

    def u(k, shape):
        return jax.random.uniform(k, shape, jnp.float32, -scale, scale)

    params = {
        'wih_f': u(k_w[0], (4 * H, E)),
        'whh_f': u(k_w[1], (4 * H, H)),
        'bih_f': u(k_w[2], (4 * H,)),
        'bhh_f': u(k_w[3], (4 * H,)),
        'wih_b': u(k_w[4], (4 * H, E)),
        'whh_b': u(k_w[5], (4 * H, H)),
        'bih_b': u(k_w[6], (4 * H,)),
        'bhh_b': u(k_w[7], (4 * H,)),
    }

    # embedding lookup (glue, plain JAX)
    x_emb = jnp.take(emb_table, token_ids, axis=0)  # (B, T, E)

    prep = prepare_lstm_params(params)              # one-time weight repack
    out = bilstm_forward(x_emb, prep)
    out = jax.block_until_ready(out)
    assert out.shape == (B, 2 * H)

    ref = bilstm_ref(x_emb, params)
    assert jnp.allclose(out, ref, atol=2e-3, rtol=2e-3), "mismatch vs reference"

    print("KERNEL_OK")
</pallas_src>

<mosaic_0001>
module attributes {stable_mosaic.version = 11 : i64} {
  func.func @bilstm_kernel(%arg0: memref<32x32xbf16, #tpu.memory_space<vmem>>, %arg1: memref<32x128xbf16, #tpu.memory_space<vmem>>, %arg2: memref<32x256xbf16, #tpu.memory_space<vmem>>, %arg3: memref<4x128xf32, #tpu.memory_space<vmem>>, %arg4: memref<2x64xf32, #tpu.memory_space<vmem>>) attributes {dimension_semantics = [], scalar_prefetch = 0 : i64, scratch_operands = 0 : i64, tpu.core_type = #tpu.core_type<tc>} {
    %c0 = arith.constant 0 : index
    %c0_0 = arith.constant 0 : index
    %0 = vector.load %arg0[%c0, %c0_0] : memref<32x32xbf16, #tpu.memory_space<vmem>>, vector<32x32xbf16>
    %c0_1 = arith.constant 0 : index
    %c0_2 = arith.constant 0 : index
    %1 = vector.load %arg1[%c0_1, %c0_2] : memref<32x128xbf16, #tpu.memory_space<vmem>>, vector<32x128xbf16>
    %cst = arith.constant dense<0.000000e+00> : vector<32x128xf32>
    %2 = tpu.matmul %0, %1, %cst {dimension_numbers = #tpu.dot_dimension_numbers<[1], [0], [0], [1], [0, 0, 1, 1], [], []>} : vector<32x32xbf16>, vector<32x128xbf16>, vector<32x128xf32> -> vector<32x128xf32>
    %c0_3 = arith.constant 0 : index
    %c0_4 = arith.constant 0 : index
    %3 = vector.load %arg3[%c0_3, %c0_4] : memref<4x128xf32, #tpu.memory_space<vmem>>, vector<4x128xf32>
    %c0_5 = arith.constant 0 : index
    %c0_6 = arith.constant 0 : index
    %4 = vector.load %arg2[%c0_5, %c0_6] : memref<32x256xbf16, #tpu.memory_space<vmem>>, vector<32x256xbf16>
    %5 = tpu.iota {dimensions = array<i32: 0>} : vector<4x1xi32>
    %c2_i32 = arith.constant 2 : i32
    %6 = vector.broadcast %c2_i32 : i32 to vector<4x1xi32>
    %7 = arith.cmpi slt, %5, %6 : vector<4x1xi32>
    %cst_7 = arith.constant 0.000000e+00 : f32
    %8 = vector.broadcast %cst_7 : f32 to vector<4x32xf32>
    %9 = vector.extract_strided_slice %2 {offsets = [0, 0], sizes = [4, 128], strides = [1, 1]} : vector<32x128xf32> to vector<4x128xf32>
    %10 = arith.addf %9, %3 : vector<4x128xf32>
    %11 = vector.extract_strided_slice %10 {offsets = [0, 0], sizes = [4, 96], strides = [1, 1]} : vector<4x128xf32> to vector<4x96xf32>
    %12 = arith.negf %11 : vector<4x96xf32>
    %13 = math.exp %12 : vector<4x96xf32>
    %cst_8 = arith.constant 1.000000e+00 : f32
    %14 = vector.broadcast %cst_8 : f32 to vector<4x96xf32>
    %15 = arith.addf %14, %13 : vector<4x96xf32>
    %16 = arith.divf %14, %15 : vector<4x96xf32>
    %17 = vector.extract_strided_slice %10 {offsets = [0, 96], sizes = [4, 32], strides = [1, 1]} : vector<4x128xf32> to vector<4x32xf32>
    %18 = math.tanh %17 : vector<4x32xf32>
    %19 = vector.extract_strided_slice %16 {offsets = [0, 0], sizes = [4, 32], strides = [1, 1]} : vector<4x96xf32> to vector<4x32xf32>
    %20 = vector.extract_strided_slice %16 {offsets = [0, 32], sizes = [4, 32], strides = [1, 1]} : vector<4x96xf32> to vector<4x32xf32>
    %21 = vector.extract_strided_slice %16 {offsets = [0, 64], sizes = [4, 32], strides = [1, 1]} : vector<4x96xf32> to vector<4x32xf32>
    %22 = arith.mulf %20, %8 : vector<4x32xf32>
    %23 = arith.mulf %19, %18 : vector<4x32xf32>
    %24 = arith.addf %22, %23 : vector<4x32xf32>
    %25 = math.tanh %24 : vector<4x32xf32>
    %26 = arith.mulf %21, %25 : vector<4x32xf32>
    %27 = vector.extract_strided_slice %2 {offsets = [4, 0], sizes = [4, 128], strides = [1, 1]} : vector<32x128xf32> to vector<4x128xf32>
    %28 = arith.addf %27, %3 : vector<4x128xf32>
    %29 = arith.truncf %26 : vector<4x32xf32> to vector<4x32xbf16>
    %cst_9 = arith.constant dense<0.000000e+00> : vector<4x256xf32>
    %30 = tpu.matmul %29, %4, %cst_9 {dimension_numbers = #tpu.dot_dimension_numbers<[1], [0], [0], [1], [0, 0, 1, 1], [], []>} : vector<4x32xbf16>, vector<32x256xbf16>, vector<4x256xf32> -> vector<4x256xf32>
    %31 = vector.extract_strided_slice %30 {offsets = [0, 0], sizes = [4, 128], strides = [1, 1]} : vector<4x256xf32> to vector<4x128xf32>
    %32 = vector.extract_strided_slice %30 {offsets = [0, 128], sizes = [4, 128], strides = [1, 1]} : vector<4x256xf32> to vector<4x128xf32>
    %33 = vector.shape_cast %7 : vector<4x1xi1> to vector<4x1xi1>
    %34 = vector.broadcast %33 : vector<4x1xi1> to vector<4x128xi1>
    %35 = arith.select %34, %31, %32 : vector<4x128xi1>, vector<4x128xf32>
    %36 = arith.addf %28, %35 : vector<4x128xf32>
    %37 = vector.extract_strided_slice %36 {offsets = [0, 0], sizes = [4, 96], strides = [1, 1]} : vector<4x128xf32> to vector<4x96xf32>
    %38 = arith.negf %37 : vector<4x96xf32>
    %39 = math.exp %38 : vector<4x96xf32>
    %cst_10 = arith.constant 1.000000e+00 : f32
    %40 = vector.broadcast %cst_10 : f32 to vector<4x96xf32>
    %41 = arith.addf %40, %39 : vector<4x96xf32>
    %42 = arith.divf %40, %41 : vector<4x96xf32>
    %43 = vector.extract_strided_slice %36 {offsets = [0, 96], sizes = [4, 32], strides = [1, 1]} : vector<4x128xf32> to vector<4x32xf32>
    %44 = math.tanh %43 : vector<4x32xf32>
    %45 = vector.extract_strided_slice %42 {offsets = [0, 0], sizes = [4, 32], strides = [1, 1]} : vector<4x96xf32> to vector<4x32xf32>
    %46 = vector.extract_strided_slice %42 {offsets = [0, 32], sizes = [4, 32], strides = [1, 1]} : vector<4x96xf32> to vector<4x32xf32>
    %47 = vector.extract_strided_slice %42 {offsets = [0, 64], sizes = [4, 32], strides = [1, 1]} : vector<4x96xf32> to vector<4x32xf32>
    %48 = arith.mulf %46, %24 : vector<4x32xf32>
    %49 = arith.mulf %45, %44 : vector<4x32xf32>
    %50 = arith.addf %48, %49 : vector<4x32xf32>
    %51 = math.tanh %50 : vector<4x32xf32>
    %52 = arith.mulf %47, %51 : vector<4x32xf32>
    %53 = vector.extract_strided_slice %2 {offsets = [8, 0], sizes = [4, 128], strides = [1, 1]} : vector<32x128xf32> to vector<4x128xf32>
    %54 = arith.addf %53, %3 : vector<4x128xf32>
    %55 = arith.truncf %52 : vector<4x32xf32> to vector<4x32xbf16>
    %cst_11 = arith.constant dense<0.000000e+00> : vector<4x256xf32>
    %56 = tpu.matmul %55, %4, %cst_11 {dimension_numbers = #tpu.dot_dimension_numbers<[1], [0], [0], [1], [0, 0, 1, 1], [], []>} : vector<4x32xbf16>, vector<32x256xbf16>, vector<4x256xf32> -> vector<4x256xf32>
    %57 = vector.extract_strided_slice %56 {offsets = [0, 0], sizes = [4, 128], strides = [1, 1]} : vector<4x256xf32> to vector<4x128xf32>
    %58 = vector.extract_strided_slice %56 {offsets = [0, 128], sizes = [4, 128], strides = [1, 1]} : vector<4x256xf32> to vector<4x128xf32>
    %59 = vector.shape_cast %7 : vector<4x1xi1> to vector<4x1xi1>
    %60 = vector.broadcast %59 : vector<4x1xi1> to vector<4x128xi1>
    %61 = arith.select %60, %57, %58 : vector<4x128xi1>, vector<4x128xf32>
    %62 = arith.addf %54, %61 : vector<4x128xf32>
    %63 = vector.extract_strided_slice %62 {offsets = [0, 0], sizes = [4, 96], strides = [1, 1]} : vector<4x128xf32> to vector<4x96xf32>
    %64 = arith.negf %63 : vector<4x96xf32>
    %65 = math.exp %64 : vector<4x96xf32>
    %cst_12 = arith.constant 1.000000e+00 : f32
    %66 = vector.broadcast %cst_12 : f32 to vector<4x96xf32>
    %67 = arith.addf %66, %65 : vector<4x96xf32>
    %68 = arith.divf %66, %67 : vector<4x96xf32>
    %69 = vector.extract_strided_slice %62 {offsets = [0, 96], sizes = [4, 32], strides = [1, 1]} : vector<4x128xf32> to vector<4x32xf32>
    %70 = math.tanh %69 : vector<4x32xf32>
    %71 = vector.extract_strided_slice %68 {offsets = [0, 0], sizes = [4, 32], strides = [1, 1]} : vector<4x96xf32> to vector<4x32xf32>
    %72 = vector.extract_strided_slice %68 {offsets = [0, 32], sizes = [4, 32], strides = [1, 1]} : vector<4x96xf32> to vector<4x32xf32>
    %73 = vector.extract_strided_slice %68 {offsets = [0, 64], sizes = [4, 32], strides = [1, 1]} : vector<4x96xf32> to vector<4x32xf32>
    %74 = arith.mulf %72, %50 : vector<4x32xf32>
    %75 = arith.mulf %71, %70 : vector<4x32xf32>
    %76 = arith.addf %74, %75 : vector<4x32xf32>
    %77 = math.tanh %76 : vector<4x32xf32>
    %78 = arith.mulf %73, %77 : vector<4x32xf32>
    %79 = vector.extract_strided_slice %2 {offsets = [12, 0], sizes = [4, 128], strides = [1, 1]} : vector<32x128xf32> to vector<4x128xf32>
    %80 = arith.addf %79, %3 : vector<4x128xf32>
    %81 = arith.truncf %78 : vector<4x32xf32> to vector<4x32xbf16>
    %cst_13 = arith.constant dense<0.000000e+00> : vector<4x256xf32>
    %82 = tpu.matmul %81, %4, %cst_13 {dimension_numbers = #tpu.dot_dimension_numbers<[1], [0], [0], [1], [0, 0, 1, 1], [], []>} : vector<4x32xbf16>, vector<32x256xbf16>, vector<4x256xf32> -> vector<4x256xf32>
    %83 = vector.extract_strided_slice %82 {offsets = [0, 0], sizes = [4, 128], strides = [1, 1]} : vector<4x256xf32> to vector<4x128xf32>
    %84 = vector.extract_strided_slice %82 {offsets = [0, 128], sizes = [4, 128], strides = [1, 1]} : vector<4x256xf32> to vector<4x128xf32>
    %85 = vector.shape_cast %7 : vector<4x1xi1> to vector<4x1xi1>
    %86 = vector.broadcast %85 : vector<4x1xi1> to vector<4x128xi1>
    %87 = arith.select %86, %83, %84 : vector<4x128xi1>, vector<4x128xf32>
    %88 = arith.addf %80, %87 : vector<4x128xf32>
    %89 = vector.extract_strided_slice %88 {offsets = [0, 0], sizes = [4, 96], strides = [1, 1]} : vector<4x128xf32> to vector<4x96xf32>
    %90 = arith.negf %89 : vector<4x96xf32>
    %91 = math.exp %90 : vector<4x96xf32>
    %cst_14 = arith.constant 1.000000e+00 : f32
    %92 = vector.broadcast %cst_14 : f32 to vector<4x96xf32>
    %93 = arith.addf %92, %91 : vector<4x96xf32>
    %94 = arith.divf %92, %93 : vector<4x96xf32>
    %95 = vector.extract_strided_slice %88 {offsets = [0, 96], sizes = [4, 32], strides = [1, 1]} : vector<4x128xf32> to vector<4x32xf32>
    %96 = math.tanh %95 : vector<4x32xf32>
    %97 = vector.extract_strided_slice %94 {offsets = [0, 0], sizes = [4, 32], strides = [1, 1]} : vector<4x96xf32> to vector<4x32xf32>
    %98 = vector.extract_strided_slice %94 {offsets = [0, 32], sizes = [4, 32], strides = [1, 1]} : vector<4x96xf32> to vector<4x32xf32>
    %99 = vector.extract_strided_slice %94 {offsets = [0, 64], sizes = [4, 32], strides = [1, 1]} : vector<4x96xf32> to vector<4x32xf32>
    %100 = arith.mulf %98, %76 : vector<4x32xf32>
    %101 = arith.mulf %97, %96 : vector<4x32xf32>
    %102 = arith.addf %100, %101 : vector<4x32xf32>
    %103 = math.tanh %102 : vector<4x32xf32>
    %104 = arith.mulf %99, %103 : vector<4x32xf32>
    %105 = vector.extract_strided_slice %2 {offsets = [16, 0], sizes = [4, 128], strides = [1, 1]} : vector<32x128xf32> to vector<4x128xf32>
    %106 = arith.addf %105, %3 : vector<4x128xf32>
    %107 = arith.truncf %104 : vector<4x32xf32> to vector<4x32xbf16>
    %cst_15 = arith.constant dense<0.000000e+00> : vector<4x256xf32>
    %108 = tpu.matmul %107, %4, %cst_15 {dimension_numbers = #tpu.dot_dimension_numbers<[1], [0], [0], [1], [0, 0, 1, 1], [], []>} : vector<4x32xbf16>, vector<32x256xbf16>, vector<4x256xf32> -> vector<4x256xf32>
    %109 = vector.extract_strided_slice %108 {offsets = [0, 0], sizes = [4, 128], strides = [1, 1]} : vector<4x256xf32> to vector<4x128xf32>
    %110 = vector.extract_strided_slice %108 {offsets = [0, 128], sizes = [4, 128], strides = [1, 1]} : vector<4x256xf32> to vector<4x128xf32>
    %111 = vector.shape_cast %7 : vector<4x1xi1> to vector<4x1xi1>
    %112 = vector.broadcast %111 : vector<4x1xi1> to vector<4x128xi1>
    %113 = arith.select %112, %109, %110 : vector<4x128xi1>, vector<4x128xf32>
    %114 = arith.addf %106, %113 : vector<4x128xf32>
    %115 = vector.extract_strided_slice %114 {offsets = [0, 0], sizes = [4, 96], strides = [1, 1]} : vector<4x128xf32> to vector<4x96xf32>
    %116 = arith.negf %115 : vector<4x96xf32>
    %117 = math.exp %116 : vector<4x96xf32>
    %cst_16 = arith.constant 1.000000e+00 : f32
    %118 = vector.broadcast %cst_16 : f32 to vector<4x96xf32>
    %119 = arith.addf %118, %117 : vector<4x96xf32>
    %120 = arith.divf %118, %119 : vector<4x96xf32>
    %121 = vector.extract_strided_slice %114 {offsets = [0, 96], sizes = [4, 32], strides = [1, 1]} : vector<4x128xf32> to vector<4x32xf32>
    %122 = math.tanh %121 : vector<4x32xf32>
    %123 = vector.extract_strided_slice %120 {offsets = [0, 0], sizes = [4, 32], strides = [1, 1]} : vector<4x96xf32> to vector<4x32xf32>
    %124 = vector.extract_strided_slice %120 {offsets = [0, 32], sizes = [4, 32], strides = [1, 1]} : vector<4x96xf32> to vector<4x32xf32>
    %125 = vector.extract_strided_slice %120 {offsets = [0, 64], sizes = [4, 32], strides = [1, 1]} : vector<4x96xf32> to vector<4x32xf32>
    %126 = arith.mulf %124, %102 : vector<4x32xf32>
    %127 = arith.mulf %123, %122 : vector<4x32xf32>
    %128 = arith.addf %126, %127 : vector<4x32xf32>
    %129 = math.tanh %128 : vector<4x32xf32>
    %130 = arith.mulf %125, %129 : vector<4x32xf32>
    %131 = vector.extract_strided_slice %2 {offsets = [20, 0], sizes = [4, 128], strides = [1, 1]} : vector<32x128xf32> to vector<4x128xf32>
    %132 = arith.addf %131, %3 : vector<4x128xf32>
    %133 = arith.truncf %130 : vector<4x32xf32> to vector<4x32xbf16>
    %cst_17 = arith.constant dense<0.000000e+00> : vector<4x256xf32>
    %134 = tpu.matmul %133, %4, %cst_17 {dimension_numbers = #tpu.dot_dimension_numbers<[1], [0], [0], [1], [0, 0, 1, 1], [], []>} : vector<4x32xbf16>, vector<32x256xbf16>, vector<4x256xf32> -> vector<4x256xf32>
    %135 = vector.extract_strided_slice %134 {offsets = [0, 0], sizes = [4, 128], strides = [1, 1]} : vector<4x256xf32> to vector<4x128xf32>
    %136 = vector.extract_strided_slice %134 {offsets = [0, 128], sizes = [4, 128], strides = [1, 1]} : vector<4x256xf32> to vector<4x128xf32>
    %137 = vector.shape_cast %7 : vector<4x1xi1> to vector<4x1xi1>
    %138 = vector.broadcast %137 : vector<4x1xi1> to vector<4x128xi1>
    %139 = arith.select %138, %135, %136 : vector<4x128xi1>, vector<4x128xf32>
    %140 = arith.addf %132, %139 : vector<4x128xf32>
    %141 = vector.extract_strided_slice %140 {offsets = [0, 0], sizes = [4, 96], strides = [1, 1]} : vector<4x128xf32> to vector<4x96xf32>
    %142 = arith.negf %141 : vector<4x96xf32>
    %143 = math.exp %142 : vector<4x96xf32>
    %cst_18 = arith.constant 1.000000e+00 : f32
    %144 = vector.broadcast %cst_18 : f32 to vector<4x96xf32>
    %145 = arith.addf %144, %143 : vector<4x96xf32>
    %146 = arith.divf %144, %145 : vector<4x96xf32>
    %147 = vector.extract_strided_slice %140 {offsets = [0, 96], sizes = [4, 32], strides = [1, 1]} : vector<4x128xf32> to vector<4x32xf32>
    %148 = math.tanh %147 : vector<4x32xf32>
    %149 = vector.extract_strided_slice %146 {offsets = [0, 0], sizes = [4, 32], strides = [1, 1]} : vector<4x96xf32> to vector<4x32xf32>
    %150 = vector.extract_strided_slice %146 {offsets = [0, 32], sizes = [4, 32], strides = [1, 1]} : vector<4x96xf32> to vector<4x32xf32>
    %151 = vector.extract_strided_slice %146 {offsets = [0, 64], sizes = [4, 32], strides = [1, 1]} : vector<4x96xf32> to vector<4x32xf32>
    %152 = arith.mulf %150, %128 : vector<4x32xf32>
    %153 = arith.mulf %149, %148 : vector<4x32xf32>
    %154 = arith.addf %152, %153 : vector<4x32xf32>
    %155 = math.tanh %154 : vector<4x32xf32>
    %156 = arith.mulf %151, %155 : vector<4x32xf32>
    %157 = vector.extract_strided_slice %2 {offsets = [24, 0], sizes = [4, 128], strides = [1, 1]} : vector<32x128xf32> to vector<4x128xf32>
    %158 = arith.addf %157, %3 : vector<4x128xf32>
    %159 = arith.truncf %156 : vector<4x32xf32> to vector<4x32xbf16>
    %cst_19 = arith.constant dense<0.000000e+00> : vector<4x256xf32>
    %160 = tpu.matmul %159, %4, %cst_19 {dimension_numbers = #tpu.dot_dimension_numbers<[1], [0], [0], [1], [0, 0, 1, 1], [], []>} : vector<4x32xbf16>, vector<32x256xbf16>, vector<4x256xf32> -> vector<4x256xf32>
    %161 = vector.extract_strided_slice %160 {offsets = [0, 0], sizes = [4, 128], strides = [1, 1]} : vector<4x256xf32> to vector<4x128xf32>
    %162 = vector.extract_strided_slice %160 {offsets = [0, 128], sizes = [4, 128], strides = [1, 1]} : vector<4x256xf32> to vector<4x128xf32>
    %163 = vector.shape_cast %7 : vector<4x1xi1> to vector<4x1xi1>
    %164 = vector.broadcast %163 : vector<4x1xi1> to vector<4x128xi1>
    %165 = arith.select %164, %161, %162 : vector<4x128xi1>, vector<4x128xf32>
    %166 = arith.addf %158, %165 : vector<4x128xf32>
    %167 = vector.extract_strided_slice %166 {offsets = [0, 0], sizes = [4, 96], strides = [1, 1]} : vector<4x128xf32> to vector<4x96xf32>
    %168 = arith.negf %167 : vector<4x96xf32>
    %169 = math.exp %168 : vector<4x96xf32>
    %cst_20 = arith.constant 1.000000e+00 : f32
    %170 = vector.broadcast %cst_20 : f32 to vector<4x96xf32>
    %171 = arith.addf %170, %169 : vector<4x96xf32>
    %172 = arith.divf %170, %171 : vector<4x96xf32>
    %173 = vector.extract_strided_slice %166 {offsets = [0, 96], sizes = [4, 32], strides = [1, 1]} : vector<4x128xf32> to vector<4x32xf32>
    %174 = math.tanh %173 : vector<4x32xf32>
    %175 = vector.extract_strided_slice %172 {offsets = [0, 0], sizes = [4, 32], strides = [1, 1]} : vector<4x96xf32> to vector<4x32xf32>
    %176 = vector.extract_strided_slice %172 {offsets = [0, 32], sizes = [4, 32], strides = [1, 1]} : vector<4x96xf32> to vector<4x32xf32>
    %177 = vector.extract_strided_slice %172 {offsets = [0, 64], sizes = [4, 32], strides = [1, 1]} : vector<4x96xf32> to vector<4x32xf32>
    %178 = arith.mulf %176, %154 : vector<4x32xf32>
    %179 = arith.mulf %175, %174 : vector<4x32xf32>
    %180 = arith.addf %178, %179 : vector<4x32xf32>
    %181 = math.tanh %180 : vector<4x32xf32>
    %182 = arith.mulf %177, %181 : vector<4x32xf32>
    %183 = vector.extract_strided_slice %2 {offsets = [28, 0], sizes = [4, 128], strides = [1, 1]} : vector<32x128xf32> to vector<4x128xf32>
    %184 = arith.addf %183, %3 : vector<4x128xf32>
    %185 = arith.truncf %182 : vector<4x32xf32> to vector<4x32xbf16>
    %cst_21 = arith.constant dense<0.000000e+00> : vector<4x256xf32>
    %186 = tpu.matmul %185, %4, %cst_21 {dimension_numbers = #tpu.dot_dimension_numbers<[1], [0], [0], [1], [0, 0, 1, 1], [], []>} : vector<4x32xbf16>, vector<32x256xbf16>, vector<4x256xf32> -> vector<4x256xf32>
    %187 = vector.extract_strided_slice %186 {offsets = [0, 0], sizes = [4, 128], strides = [1, 1]} : vector<4x256xf32> to vector<4x128xf32>
    %188 = vector.extract_strided_slice %186 {offsets = [0, 128], sizes = [4, 128], strides = [1, 1]} : vector<4x256xf32> to vector<4x128xf32>
    %189 = vector.shape_cast %7 : vector<4x1xi1> to vector<4x1xi1>
    %190 = vector.broadcast %189 : vector<4x1xi1> to vector<4x128xi1>
    %191 = arith.select %190, %187, %188 : vector<4x128xi1>, vector<4x128xf32>
    %192 = arith.addf %184, %191 : vector<4x128xf32>
    %193 = vector.extract_strided_slice %192 {offsets = [0, 0], sizes = [4, 96], strides = [1, 1]} : vector<4x128xf32> to vector<4x96xf32>
    %194 = arith.negf %193 : vector<4x96xf32>
    %195 = math.exp %194 : vector<4x96xf32>
    %cst_22 = arith.constant 1.000000e+00 : f32
    %196 = vector.broadcast %cst_22 : f32 to vector<4x96xf32>
    %197 = arith.addf %196, %195 : vector<4x96xf32>
    %198 = arith.divf %196, %197 : vector<4x96xf32>
    %199 = vector.extract_strided_slice %192 {offsets = [0, 96], sizes = [4, 32], strides = [1, 1]} : vector<4x128xf32> to vector<4x32xf32>
    %200 = math.tanh %199 : vector<4x32xf32>
    %201 = vector.extract_strided_slice %198 {offsets = [0, 0], sizes = [4, 32], strides = [1, 1]} : vector<4x96xf32> to vector<4x32xf32>
    %202 = vector.extract_strided_slice %198 {offsets = [0, 32], sizes = [4, 32], strides = [1, 1]} : vector<4x96xf32> to vector<4x32xf32>
    %203 = vector.extract_strided_slice %198 {offsets = [0, 64], sizes = [4, 32], strides = [1, 1]} : vector<4x96xf32> to vector<4x32xf32>
    %204 = arith.mulf %202, %180 : vector<4x32xf32>
    %205 = arith.mulf %201, %200 : vector<4x32xf32>
    %206 = arith.addf %204, %205 : vector<4x32xf32>
    %207 = math.tanh %206 : vector<4x32xf32>
    %208 = arith.mulf %203, %207 : vector<4x32xf32>
    %209 = vector.extract_strided_slice %208 {offsets = [0, 0], sizes = [2, 32], strides = [1, 1]} : vector<4x32xf32> to vector<2x32xf32>
    %c0_23 = arith.constant 0 : index
    %c0_24 = arith.constant 0 : index
    %210 = vector.load %arg4[%c0_23, %c0_24] : memref<2x64xf32, #tpu.memory_space<vmem>>, vector<2x32xf32>
    tpu.vector_store %arg4[%c0_23, %c0_24], %209 {strides = array<i32>} : memref<2x64xf32, #tpu.memory_space<vmem>>, vector<2x32xf32>,
    %211 = vector.extract_strided_slice %208 {offsets = [2, 0], sizes = [2, 32], strides = [1, 1]} : vector<4x32xf32> to vector<2x32xf32>
    %c0_25 = arith.constant 0 : index
    %c32 = arith.constant 32 : index
    %212 = vector.load %arg4[%c0_25, %c32] : memref<2x64xf32, #tpu.memory_space<vmem>>, vector<2x32xf32>
    tpu.vector_store %arg4[%c0_25, %c32], %211 {strides = array<i32>} : memref<2x64xf32, #tpu.memory_space<vmem>>, vector<2x32xf32>,
    return
  }
}

</mosaic_0001>

<llo_original>
// kernel: bilstm_forward.1
$region0: #{bilstm_forward.1}
  #allocation0 [shape = 'u32[]', space=smem, size = 0x4, offset = 0x4, fixed_abs, tag = 'smem constant byte address 0x4 - core index']
  #allocation1 [shape = 'u32[72,128]{1,0:T(1,128)}', space=vmem, size = 0x9000, scoped, tag = 'internal scratch']
  %s0 = inlined_call_operand.vmem [shape: bf16[32,32], index: 0, kind: input, shape index: {}]
  %s1 = inlined_call_operand.vmem [shape: bf16[32,128], index: 1, kind: input, shape index: {}]
  %s2 = inlined_call_operand.vmem [shape: bf16[32,256], index: 2, kind: input, shape index: {}]
  %s3 = inlined_call_operand.vmem [shape: f32[4,128], index: 3, kind: input, shape index: {}]
  %s4 = inlined_call_operand.hbm [shape: f32[2,64], index: 4, kind: output, shape index: {}]
  %s5 = sld [smem:[#allocation0]]
  $region26: #{bilstm_forward.1} parent=0
    _
  %s7 = ssub.s32 1, %s5
  %s8 = scalar_select 0, %s7, %s5
  $region1: #{bilstm_forward.1} parent=0
    #allocation2 [shape = 'u8[1024]{0}', space=vmem, size = 0x400, scoped, tag = 'output window, operand 0, single buffered']
    #allocation3 [shape = 's32[1]{0}', space=sflag, size = 0x4, scoped, tag = 'scoped memory for bilstm_forward.1']
    %9 = vsyncpa [#allocation3], 0
    // Predicated region
    $region2: #{bilstm_forward.1} parent=1 // pred_check
      _
    $region3: #{bilstm_forward.1} parent=1 // pred_check_branch
      %11 = sbr.rel (0) target = $region5
    $region4: #{bilstm_forward.1} parent=1 // pred_region
      _
    $region5: #{bilstm_forward.1} parent=1 // pred_fallthru
      _
    // Predicated region
    $region6: #{bilstm_forward.1} parent=1 // pred_check
      _
    $region7: #{bilstm_forward.1} parent=1 // pred_check_branch
      %13 = sbr.rel (0) target = $region9
    $region8: #{bilstm_forward.1} parent=1 // pred_region
      _
    $region9: #{bilstm_forward.1} parent=1 // pred_fallthru
      _
    // Predicated region
    $region10: #{bilstm_forward.1} parent=1 // pred_check
      _
    $region11: #{bilstm_forward.1} parent=1 // pred_check_branch
      %15 = sbr.rel (0) target = $region13
    $region12: #{bilstm_forward.1} parent=1 // pred_region
      _
    $region13: #{bilstm_forward.1} parent=1 // pred_fallthru
      _
    // Predicated region
    $region14: #{bilstm_forward.1} parent=1 // pred_check
      _
    $region15: #{bilstm_forward.1} parent=1 // pred_check_branch
      %17 = sbr.rel (0) target = $region17
    $region16: #{bilstm_forward.1} parent=1 // pred_region
      _
    $region17: #{bilstm_forward.1} parent=1 // pred_fallthru
      _
    %v19 = vld [vmem:[%s0] sm:$0xf]
    %v20 = vld [vmem:[%s0 + $0x4] sm:$0xf]
    %v21 = vld [vmem:[%s0 + $0x8] sm:$0xf]
    %v22 = vld [vmem:[%s0 + $0xc] sm:$0xf]
    %v23 = vld [vmem:[%s1] sm:$0xf]
    %v24 = vld [vmem:[%s1 + $0x4] sm:$0xf]
    %v25 = vld [vmem:[%s1 + $0x8] sm:$0xf]
    %v26 = vld [vmem:[%s1 + $0xc] sm:$0xf]
    %v31 = vunpack.c.l.b16 %v19
    %v32 = vunpack.c.l.b16 %v20
    %v33 = vunpack.c.l.b16 %v21
    %v34 = vunpack.c.l.b16 %v22
    %v35 = vpack.c.b16 %v32, %v31
    %v36 = vpack.c.b16 %v34, %v33
    %v41 = vunpack.c.l.b16 %v23
    %v42 = vunpack.c.l.b16 %v24
    %v43 = vunpack.c.l.b16 %v25
    %v44 = vunpack.c.l.b16 %v26
    %v45 = vpack.c.b16 %v42, %v41
    %v46 = vpack.c.b16 %v44, %v43
    %vm49 = vcmask 261120
    %v51 = vsel %vm49, %v35, 0
    %v54 = vsel %vm49, %v36, 0
    %56 = vmatpush.bf16.msra.mxu0 0
    %57 = vmatpush.bf16.msra.mxu0 0
    %58 = vmatpush.bf16.msra.mxu0 0
    %59 = vmatpush.bf16.msra.mxu0 0
    %60 = vmatpush.bf16.msra.mxu0 0
    %61 = vmatpush.bf16.msra.mxu0 0
    %62 = vmatpush.bf16.msra.mxu0 %v46
    %63 = vmatpush.bf16.msra.mxu0 %v45
    %64 = vmatmul.bf16.gmra.mxu0 %v51
    %v65 = vpop.f32.mrf.mxu0
    %v66 = vadd.f32 0.0, %v65
    %v67 = vpop.f32.mrf.mxu0
    %v68 = vadd.f32 0.0, %v67
    %69 = vmatmul.bf16.gmra.mxu0 %v54
    %v70 = vpop.f32.mrf.mxu0
    %v71 = vadd.f32 0.0, %v70
    %v72 = vpop.f32.mrf.mxu0
    %v73 = vadd.f32 0.0, %v72
    %74 = vdwg.mxu0
    %v75 = vld [vmem:[%s3] sm:$0xf]
    %v76 = vld [vmem:[%s2] sm:$0xff]
    %v77 = vld [vmem:[%s2 + $0x8] sm:$0xff]
    %v78 = vld [vmem:[%s2 + $0x10] sm:$0xff]
    %v79 = vld [vmem:[%s2 + $0x18] sm:$0xff]
    %v80 = vlaneseq
    %v81 = vshrl.u32 %v80, 7
    %vm82 = vcmp.lt.s32.totalorder %v81, 2
    %v83 = vadd.f32 %v66, %v75
    %v84 = vxor.u32 %v83, 2147483648
    %v85 = vmul.f32 %v84, 1.442695
    %v86 = vpow.pop %v85
    %v87 = vadd.f32 %v86, 1.0
    %v88 = vrcp.pop %v87
    %v89 = vmul.f32 %v87, %v88
    %v90 = vsub.f32 1.0, %v89
    %v91 = vmul.f32 %v88, %v90
    %v92 = vadd.f32 %v88, %v91
    %vm93 = vweird.f32 %v87
    %vm94 = vweird.f32 %v88
    %vm95 = vmor %vm93, %vm94
    %v96 = vsel %vm95, %v88, %v92
    %v97 = vand.u32 2147483647, %v87
    %vm98 = vcmp.eq.f32.partialorder %v97, 8.507059e+37
    %v99 = vand.u32 %v87, 2147483648
    %v100 = vor.u32 1.1754944e-38, %v99
    %v101 = vsel %vm98, %v100, %v96
    %v102 = vmul.f32 1.0, %v101
    %v103 = vtanh.pop %v83
    %v104 = vmul.f32 %v102, 0.0
    %106 = vrot.lane.b32.xlu0 %v103, 32
    %v107 = vpop.permute.xlu0 %106
    %v109 = vmul.f32 %v102, %v107
    %111 = vrot.lane.b32.xlu0 %v109, 32
    %v112 = vpop.permute.xlu0 %111
    %v114 = vadd.f32 %v104, %v112
    %v115 = vtanh.pop %v114
    %117 = vrot.lane.b32.xlu0 %v115, 32
    %v118 = vpop.permute.xlu0 %117
    %v120 = vmul.f32 %v102, %v118
    %v122 = vrot.slane %v75, 4
    %v124 = vadd.f32 %v66, %v122
    %v125 = vpack.c.bf16 %v120, %v120
    %127 = vrot.lane.b32.xlu0 %v125, 64
    %v128 = vpop.permute.xlu0 %127
    %v133 = vunpack.c.l.b16 %v76
    %v134 = vunpack.c.h.b16 %v76
    %v135 = vunpack.c.l.b16 %v77
    %v136 = vunpack.c.h.b16 %v77
    %v137 = vunpack.c.l.b16 %v78
    %v138 = vunpack.c.h.b16 %v78
    %v139 = vunpack.c.l.b16 %v79
    %v140 = vunpack.c.h.b16 %v79
    %v141 = vpack.c.b16 %v135, %v133
    %v142 = vpack.c.b16 %v136, %v134
    %v143 = vpack.c.b16 %v139, %v137
    %v144 = vpack.c.b16 %v140, %v138
    %v150 = vsel %vm49, %v128, 0
    %152 = vmatpush.bf16.msra.mxu0 0
    %153 = vmatpush.bf16.msra.mxu0 0
    %154 = vmatpush.bf16.msra.mxu0 0
    %155 = vmatpush.bf16.msra.mxu0 0
    %156 = vmatpush.bf16.msra.mxu0 0
    %157 = vmatpush.bf16.msra.mxu0 0
    %158 = vmatpush.bf16.msra.mxu0 %v143
    %159 = vmatpush.bf16.msra.mxu0 %v141
    %160 = vmatmul.bf16.gmra.mxu0 %v150
    %v161 = vpop.f32.mrf.mxu0
    %v162 = vadd.f32 0.0, %v161
    %v163 = vpop.f32.mrf.mxu0
    %164 = vdwg.mxu0
    %165 = vmatpush.bf16.msra.mxu0 0
    %166 = vmatpush.bf16.msra.mxu0 0
    %167 = vmatpush.bf16.msra.mxu0 0
    %168 = vmatpush.bf16.msra.mxu0 0
    %169 = vmatpush.bf16.msra.mxu0 0
    %170 = vmatpush.bf16.msra.mxu0 0
    %171 = vmatpush.bf16.msra.mxu0 %v144
    %172 = vmatpush.bf16.msra.mxu0 %v142
    %173 = vmatmul.bf16.gmra.mxu0 %v150
    %v174 = vpop.f32.mrf.mxu0
    %v175 = vadd.f32 0.0, %v174
    %v176 = vpop.f32.mrf.mxu0
    %177 = vdwg.mxu0
    %v178 = vsel %vm82, 1, 0
    %vm179 = vcmp.eq.s32.totalorder %v178, 1
    %v180 = vsel %vm179, %v162, %v175
    %v182 = vrot.slane %v180, 4
    %v184 = vadd.f32 %v124, %v182
    %v185 = vxor.u32 %v184, 2147483648
    %v186 = vmul.f32 %v185, 1.442695
    %v187 = vpow.pop %v186
    %v188 = vadd.f32 %v187, 1.0
    %v189 = vrcp.pop %v188
    %v190 = vmul.f32 %v188, %v189
    %v191 = vsub.f32 1.0, %v190
    %v192 = vmul.f32 %v189, %v191
    %v193 = vadd.f32 %v189, %v192
    %vm194 = vweird.f32 %v188
    %vm195 = vweird.f32 %v189
    %vm196 = vmor %vm194, %vm195
    %v197 = vsel %vm196, %v189, %v193
    %v198 = vand.u32 2147483647, %v188
    %vm199 = vcmp.eq.f32.partialorder %v198, 8.507059e+37
    %v200 = vand.u32 %v188, 2147483648
    %v201 = vor.u32 1.1754944e-38, %v200
    %v202 = vsel %vm199, %v201, %v197
    %v203 = vmul.f32 1.0, %v202
    %v204 = vtanh.pop %v184
    %v206 = vrot.slane %v114, 4
    %v208 = vmul.f32 %v203, %v206
    %210 = vrot.lane.b32.xlu0 %v204, 32
    %v211 = vpop.permute.xlu0 %210
    %v213 = vmul.f32 %v203, %v211
    %215 = vrot.lane.b32.xlu0 %v213, 32
    %v216 = vpop.permute.xlu0 %215
    %v218 = vadd.f32 %v208, %v216
    %v219 = vtanh.pop %v218
    %221 = vrot.lane.b32.xlu0 %v219, 32
    %v222 = vpop.permute.xlu0 %221
    %v224 = vmul.f32 %v203, %v222
    %v225 = vadd.f32 %v68, %v75
    %v226 = vpack.c.bf16 %v224, %v224
    %v228 = vrot.slane %v226, 2
    %229 = vrot.lane.b32.xlu0 %v228, 64
    %v230 = vpop.permute.xlu0 %229
    %v232 = vsel %vm49, %v230, 0
    %234 = vmatpush.bf16.msra.mxu0 0
    %235 = vmatpush.bf16.msra.mxu0 0
    %236 = vmatpush.bf16.msra.mxu0 0
    %237 = vmatpush.bf16.msra.mxu0 0
    %238 = vmatpush.bf16.msra.mxu0 0
    %239 = vmatpush.bf16.msra.mxu0 0
    %240 = vmatpush.bf16.msra.mxu0 %v143
    %241 = vmatpush.bf16.msra.mxu0 %v141
    %242 = vmatmul.bf16.gmra.mxu0 %v232
    %v243 = vpop.f32.mrf.mxu0
    %v244 = vadd.f32 0.0, %v243
    %v245 = vpop.f32.mrf.mxu0
    %246 = vdwg.mxu0
    %247 = vmatpush.bf16.msra.mxu0 0
    %248 = vmatpush.bf16.msra.mxu0 0
    %249 = vmatpush.bf16.msra.mxu0 0
    %250 = vmatpush.bf16.msra.mxu0 0
    %251 = vmatpush.bf16.msra.mxu0 0
    %252 = vmatpush.bf16.msra.mxu0 0
    %253 = vmatpush.bf16.msra.mxu0 %v144
    %254 = vmatpush.bf16.msra.mxu0 %v142
    %255 = vmatmul.bf16.gmra.mxu0 %v232
    %v256 = vpop.f32.mrf.mxu0
    %v257 = vadd.f32 0.0, %v256
    %v258 = vpop.f32.mrf.mxu0
    %259 = vdwg.mxu0
    %v260 = vsel %vm179, %v244, %v257
    %v261 = vadd.f32 %v225, %v260
    %v262 = vxor.u32 %v261, 2147483648
    %v263 = vmul.f32 %v262, 1.442695
    %v264 = vpow.pop %v263
    %v265 = vadd.f32 %v264, 1.0
    %v266 = vrcp.pop %v265
    %v267 = vmul.f32 %v265, %v266
    %v268 = vsub.f32 1.0, %v267
    %v269 = vmul.f32 %v266, %v268
    %v270 = vadd.f32 %v266, %v269
    %vm271 = vweird.f32 %v265
    %vm272 = vweird.f32 %v266
    %vm273 = vmor %vm271, %vm272
    %v274 = vsel %vm273, %v266, %v270
    %v275 = vand.u32 2147483647, %v265
    %vm276 = vcmp.eq.f32.partialorder %v275, 8.507059e+37
    %v277 = vand.u32 %v265, 2147483648
    %v278 = vor.u32 1.1754944e-38, %v277
    %v279 = vsel %vm276, %v278, %v274
    %v280 = vmul.f32 1.0, %v279
    %v281 = vtanh.pop %v261
    %v283 = vrot.slane %v218, 4
    %v285 = vmul.f32 %v280, %v283
    %287 = vrot.lane.b32.xlu0 %v281, 32
    %v288 = vpop.permute.xlu0 %287
    %v290 = vmul.f32 %v280, %v288
    %292 = vrot.lane.b32.xlu0 %v290, 32
    %v293 = vpop.permute.xlu0 %292
    %v295 = vadd.f32 %v285, %v293
    %v296 = vtanh.pop %v295
    %298 = vrot.lane.b32.xlu0 %v296, 32
    %v299 = vpop.permute.xlu0 %298
    %v301 = vmul.f32 %v280, %v299
    %v302 = vadd.f32 %v68, %v122
    %v303 = vpack.c.bf16 %v301, %v301
    %305 = vrot.lane.b32.xlu0 %v303, 64
    %v306 = vpop.permute.xlu0 %305
    %v308 = vsel %vm49, %v306, 0
    %310 = vmatpush.bf16.msra.mxu0 0
    %311 = vmatpush.bf16.msra.mxu0 0
    %312 = vmatpush.bf16.msra.mxu0 0
    %313 = vmatpush.bf16.msra.mxu0 0
    %314 = vmatpush.bf16.msra.mxu0 0
    %315 = vmatpush.bf16.msra.mxu0 0
    %316 = vmatpush.bf16.msra.mxu0 %v143
    %317 = vmatpush.bf16.msra.mxu0 %v141
    %318 = vmatmul.bf16.gmra.mxu0 %v308
    %v319 = vpop.f32.mrf.mxu0
    %v320 = vadd.f32 0.0, %v319
    %v321 = vpop.f32.mrf.mxu0
    %322 = vdwg.mxu0
    %323 = vmatpush.bf16.msra.mxu0 0
    %324 = vmatpush.bf16.msra.mxu0 0
    %325 = vmatpush.bf16.msra.mxu0 0
    %326 = vmatpush.bf16.msra.mxu0 0
    %327 = vmatpush.bf16.msra.mxu0 0
    %328 = vmatpush.bf16.msra.mxu0 0
    %329 = vmatpush.bf16.msra.mxu0 %v144
    %330 = vmatpush.bf16.msra.mxu0 %v142
    %331 = vmatmul.bf16.gmra.mxu0 %v308
    %v332 = vpop.f32.mrf.mxu0
    %v333 = vadd.f32 0.0, %v332
    %v334 = vpop.f32.mrf.mxu0
    %335 = vdwg.mxu0
    %v336 = vsel %vm179, %v320, %v333
    %v338 = vrot.slane %v336, 4
    %v340 = vadd.f32 %v302, %v338
    %v341 = vxor.u32 %v340, 2147483648
    %v342 = vmul.f32 %v341, 1.442695
    %v343 = vpow.pop %v342
    %v344 = vadd.f32 %v343, 1.0
    %v345 = vrcp.pop %v344
    %v346 = vmul.f32 %v344, %v345
    %v347 = vsub.f32 1.0, %v346
    %v348 = vmul.f32 %v345, %v347
    %v349 = vadd.f32 %v345, %v348
    %vm350 = vweird.f32 %v344
    %vm351 = vweird.f32 %v345
    %vm352 = vmor %vm350, %vm351
    %v353 = vsel %vm352, %v345, %v349
    %v354 = vand.u32 2147483647, %v344
    %vm355 = vcmp.eq.f32.partialorder %v354, 8.507059e+37
    %v356 = vand.u32 %v344, 2147483648
    %v357 = vor.u32 1.1754944e-38, %v356
    %v358 = vsel %vm355, %v357, %v353
    %v359 = vmul.f32 1.0, %v358
    %v360 = vtanh.pop %v340
    %v362 = vrot.slane %v295, 4
    %v364 = vmul.f32 %v359, %v362
    %366 = vrot.lane.b32.xlu0 %v360, 32
    %v367 = vpop.permute.xlu0 %366
    %v369 = vmul.f32 %v359, %v367
    %371 = vrot.lane.b32.xlu0 %v369, 32
    %v372 = vpop.permute.xlu0 %371
    %v374 = vadd.f32 %v364, %v372
    %v375 = vtanh.pop %v374
    %377 = vrot.lane.b32.xlu0 %v375, 32
    %v378 = vpop.permute.xlu0 %377
    %v380 = vmul.f32 %v359, %v378
    %v381 = vadd.f32 %v71, %v75
    %v382 = vpack.c.bf16 %v380, %v380
    %v384 = vrot.slane %v382, 2
    %385 = vrot.lane.b32.xlu0 %v384, 64
    %v386 = vpop.permute.xlu0 %385
    %v388 = vsel %vm49, %v386, 0
    %390 = vmatpush.bf16.msra.mxu0 0
    %391 = vmatpush.bf16.msra.mxu0 0
    %392 = vmatpush.bf16.msra.mxu0 0
    %393 = vmatpush.bf16.msra.mxu0 0
    %394 = vmatpush.bf16.msra.mxu0 0
    %395 = vmatpush.bf16.msra.mxu0 0
    %396 = vmatpush.bf16.msra.mxu0 %v143
    %397 = vmatpush.bf16.msra.mxu0 %v141
    %398 = vmatmul.bf16.gmra.mxu0 %v388
    %v399 = vpop.f32.mrf.mxu0
    %v400 = vadd.f32 0.0, %v399
    %v401 = vpop.f32.mrf.mxu0
    %402 = vdwg.mxu0
    %403 = vmatpush.bf16.msra.mxu0 0
    %404 = vmatpush.bf16.msra.mxu0 0
    %405 = vmatpush.bf16.msra.mxu0 0
    %406 = vmatpush.bf16.msra.mxu0 0
    %407 = vmatpush.bf16.msra.mxu0 0
    %408 = vmatpush.bf16.msra.mxu0 0
    %409 = vmatpush.bf16.msra.mxu0 %v144
    %410 = vmatpush.bf16.msra.mxu0 %v142
    %411 = vmatmul.bf16.gmra.mxu0 %v388
    %v412 = vpop.f32.mrf.mxu0
    %v413 = vadd.f32 0.0, %v412
    %v414 = vpop.f32.mrf.mxu0
    %415 = vdwg.mxu0
    %v416 = vsel %vm179, %v400, %v413
    %v417 = vadd.f32 %v381, %v416
    %v418 = vxor.u32 %v417, 2147483648
    %v419 = vmul.f32 %v418, 1.442695
    %v420 = vpow.pop %v419
    %v421 = vadd.f32 %v420, 1.0
    %v422 = vrcp.pop %v421
    %v423 = vmul.f32 %v421, %v422
    %v424 = vsub.f32 1.0, %v423
    %v425 = vmul.f32 %v422, %v424
    %v426 = vadd.f32 %v422, %v425
    %vm427 = vweird.f32 %v421
    %vm428 = vweird.f32 %v422
    %vm429 = vmor %vm427, %vm428
    %v430 = vsel %vm429, %v422, %v426
    %v431 = vand.u32 2147483647, %v421
    %vm432 = vcmp.eq.f32.partialorder %v431, 8.507059e+37
    %v433 = vand.u32 %v421, 2147483648
    %v434 = vor.u32 1.1754944e-38, %v433
    %v435 = vsel %vm432, %v434, %v430
    %v436 = vmul.f32 1.0, %v435
    %v437 = vtanh.pop %v417
    %v439 = vrot.slane %v374, 4
    %v441 = vmul.f32 %v436, %v439
    %443 = vrot.lane.b32.xlu0 %v437, 32
    %v444 = vpop.permute.xlu0 %443
    %v446 = vmul.f32 %v436, %v444
    %448 = vrot.lane.b32.xlu0 %v446, 32
    %v449 = vpop.permute.xlu0 %448
    %v451 = vadd.f32 %v441, %v449
    %v452 = vtanh.pop %v451
    %454 = vrot.lane.b32.xlu0 %v452, 32
    %v455 = vpop.permute.xlu0 %454
    %v457 = vmul.f32 %v436, %v455
    %v458 = vadd.f32 %v71, %v122
    %v459 = vpack.c.bf16 %v457, %v457
    %461 = vrot.lane.b32.xlu0 %v459, 64
    %v462 = vpop.permute.xlu0 %461
    %v464 = vsel %vm49, %v462, 0
    %466 = vmatpush.bf16.msra.mxu0 0
    %467 = vmatpush.bf16.msra.mxu0 0
    %468 = vmatpush.bf16.msra.mxu0 0
    %469 = vmatpush.bf16.msra.mxu0 0
    %470 = vmatpush.bf16.msra.mxu0 0
    %471 = vmatpush.bf16.msra.mxu0 0
    %472 = vmatpush.bf16.msra.mxu0 %v143
    %473 = vmatpush.bf16.msra.mxu0 %v141
    %474 = vmatmul.bf16.gmra.mxu0 %v464
    %v475 = vpop.f32.mrf.mxu0
    %v476 = vadd.f32 0.0, %v475
    %v477 = vpop.f32.mrf.mxu0
    %478 = vdwg.mxu0
    %479 = vmatpush.bf16.msra.mxu0 0
    %480 = vmatpush.bf16.msra.mxu0 0
    %481 = vmatpush.bf16.msra.mxu0 0
    %482 = vmatpush.bf16.msra.mxu0 0
    %483 = vmatpush.bf16.msra.mxu0 0
    %484 = vmatpush.bf16.msra.mxu0 0
    %485 = vmatpush.bf16.msra.mxu0 %v144
    %486 = vmatpush.bf16.msra.mxu0 %v142
    %487 = vmatmul.bf16.gmra.mxu0 %v464
    %v488 = vpop.f32.mrf.mxu0
    %v489 = vadd.f32 0.0, %v488
    %v490 = vpop.f32.mrf.mxu0
    %491 = vdwg.mxu0
    %v492 = vsel %vm179, %v476, %v489
    %v494 = vrot.slane %v492, 4
    %v496 = vadd.f32 %v458, %v494
    %v497 = vxor.u32 %v496, 2147483648
    %v498 = vmul.f32 %v497, 1.442695
    %v499 = vpow.pop %v498
    %v500 = vadd.f32 %v499, 1.0
    %v501 = vrcp.pop %v500
    %v502 = vmul.f32 %v500, %v501
    %v503 = vsub.f32 1.0, %v502
    %v504 = vmul.f32 %v501, %v503
    %v505 = vadd.f32 %v501, %v504
    %vm506 = vweird.f32 %v500
    %vm507 = vweird.f32 %v501
    %vm508 = vmor %vm506, %vm507
    %v509 = vsel %vm508, %v501, %v505
    %v510 = vand.u32 2147483647, %v500
    %vm511 = vcmp.eq.f32.partialorder %v510, 8.507059e+37
    %v512 = vand.u32 %v500, 2147483648
    %v513 = vor.u32 1.1754944e-38, %v512
    %v514 = vsel %vm511, %v513, %v509
    %v515 = vmul.f32 1.0, %v514
    %v516 = vtanh.pop %v496
    %v518 = vrot.slane %v451, 4
    %v520 = vmul.f32 %v515, %v518
    %522 = vrot.lane.b32.xlu0 %v516, 32
    %v523 = vpop.permute.xlu0 %522
    %v525 = vmul.f32 %v515, %v523
    %527 = vrot.lane.b32.xlu0 %v525, 32
    %v528 = vpop.permute.xlu0 %527
    %v530 = vadd.f32 %v520, %v528
    %v531 = vtanh.pop %v530
    %533 = vrot.lane.b32.xlu0 %v531, 32
    %v534 = vpop.permute.xlu0 %533
    %v536 = vmul.f32 %v515, %v534
    %v537 = vadd.f32 %v73, %v75
    %v538 = vpack.c.bf16 %v536, %v536
    %v540 = vrot.slane %v538, 2
    %541 = vrot.lane.b32.xlu0 %v540, 64
    %v542 = vpop.permute.xlu0 %541
    %v544 = vsel %vm49, %v542, 0
    %546 = vmatpush.bf16.msra.mxu0 0
    %547 = vmatpush.bf16.msra.mxu0 0
    %548 = vmatpush.bf16.msra.mxu0 0
    %549 = vmatpush.bf16.msra.mxu0 0
    %550 = vmatpush.bf16.msra.mxu0 0
    %551 = vmatpush.bf16.msra.mxu0 0
    %552 = vmatpush.bf16.msra.mxu0 %v143
    %553 = vmatpush.bf16.msra.mxu0 %v141
    %554 = vmatmul.bf16.gmra.mxu0 %v544
    %v555 = vpop.f32.mrf.mxu0
    %v556 = vadd.f32 0.0, %v555
    %v557 = vpop.f32.mrf.mxu0
    %558 = vdwg.mxu0
    %559 = vmatpush.bf16.msra.mxu0 0
    %560 = vmatpush.bf16.msra.mxu0 0
    %561 = vmatpush.bf16.msra.mxu0 0
    %562 = vmatpush.bf16.msra.mxu0 0
    %563 = vmatpush.bf16.msra.mxu0 0
    %564 = vmatpush.bf16.msra.mxu0 0
    %565 = vmatpush.bf16.msra.mxu0 %v144
    %566 = vmatpush.bf16.msra.mxu0 %v142
    %567 = vmatmul.bf16.gmra.mxu0 %v544
    %v568 = vpop.f32.mrf.mxu0
    %v569 = vadd.f32 0.0, %v568
    %v570 = vpop.f32.mrf.mxu0
    %571 = vdwg.mxu0
    %v572 = vsel %vm179, %v556, %v569
    %v573 = vadd.f32 %v537, %v572
    %v574 = vxor.u32 %v573, 2147483648
    %v575 = vmul.f32 %v574, 1.442695
    %v576 = vpow.pop %v575
    %v577 = vadd.f32 %v576, 1.0
    %v578 = vrcp.pop %v577
    %v579 = vmul.f32 %v577, %v578
    %v580 = vsub.f32 1.0, %v579
    %v581 = vmul.f32 %v578, %v580
    %v582 = vadd.f32 %v578, %v581
    %vm583 = vweird.f32 %v577
    %vm584 = vweird.f32 %v578
    %vm585 = vmor %vm583, %vm584
    %v586 = vsel %vm585, %v578, %v582
    %v587 = vand.u32 2147483647, %v577
    %vm588 = vcmp.eq.f32.partialorder %v587, 8.507059e+37
    %v589 = vand.u32 %v577, 2147483648
    %v590 = vor.u32 1.1754944e-38, %v589
    %v591 = vsel %vm588, %v590, %v586
    %v592 = vmul.f32 1.0, %v591
    %v593 = vtanh.pop %v573
    %v595 = vrot.slane %v530, 4
    %v597 = vmul.f32 %v592, %v595
    %599 = vrot.lane.b32.xlu0 %v593, 32
    %v600 = vpop.permute.xlu0 %599
    %v602 = vmul.f32 %v592, %v600
    %604 = vrot.lane.b32.xlu0 %v602, 32
    %v605 = vpop.permute.xlu0 %604
    %v607 = vadd.f32 %v597, %v605
    %v608 = vtanh.pop %v607
    %610 = vrot.lane.b32.xlu0 %v608, 32
    %v611 = vpop.permute.xlu0 %610
    %v613 = vmul.f32 %v592, %v611
    %v614 = vadd.f32 %v73, %v122
    %v615 = vpack.c.bf16 %v613, %v613
    %617 = vrot.lane.b32.xlu0 %v615, 64
    %v618 = vpop.permute.xlu0 %617
    %v620 = vsel %vm49, %v618, 0
    %622 = vmatpush.bf16.msra.mxu0 0
    %623 = vmatpush.bf16.msra.mxu0 0
    %624 = vmatpush.bf16.msra.mxu0 0
    %625 = vmatpush.bf16.msra.mxu0 0
    %626 = vmatpush.bf16.msra.mxu0 0
    %627 = vmatpush.bf16.msra.mxu0 0
    %628 = vmatpush.bf16.msra.mxu0 %v143
    %629 = vmatpush.bf16.msra.mxu0 %v141
    %630 = vmatmul.bf16.gmra.mxu0 %v620
    %v631 = vpop.f32.mrf.mxu0
    %v632 = vadd.f32 0.0, %v631
    %v633 = vpop.f32.mrf.mxu0
    %634 = vdwg.mxu0
    %635 = vmatpush.bf16.msra.mxu0 0
    %636 = vmatpush.bf16.msra.mxu0 0
    %637 = vmatpush.bf16.msra.mxu0 0
    %638 = vmatpush.bf16.msra.mxu0 0
    %639 = vmatpush.bf16.msra.mxu0 0
    %640 = vmatpush.bf16.msra.mxu0 0
    %641 = vmatpush.bf16.msra.mxu0 %v144
    %642 = vmatpush.bf16.msra.mxu0 %v142
    %643 = vmatmul.bf16.gmra.mxu0 %v620
    %v644 = vpop.f32.mrf.mxu0
    %v645 = vadd.f32 0.0, %v644
    %v646 = vpop.f32.mrf.mxu0
    %647 = vdwg.mxu0
    %v648 = vsel %vm179, %v632, %v645
    %v650 = vrot.slane %v648, 4
    %v652 = vadd.f32 %v614, %v650
    %v653 = vxor.u32 %v652, 2147483648
    %v654 = vmul.f32 %v653, 1.442695
    %v655 = vpow.pop %v654
    %v656 = vadd.f32 %v655, 1.0
    %v657 = vrcp.pop %v656
    %v658 = vmul.f32 %v656, %v657
    %v659 = vsub.f32 1.0, %v658
    %v660 = vmul.f32 %v657, %v659
    %v661 = vadd.f32 %v657, %v660
    %vm662 = vweird.f32 %v656
    %vm663 = vweird.f32 %v657
    %vm664 = vmor %vm662, %vm663
    %v665 = vsel %vm664, %v657, %v661
    %v666 = vand.u32 2147483647, %v656
    %vm667 = vcmp.eq.f32.partialorder %v666, 8.507059e+37
    %v668 = vand.u32 %v656, 2147483648
    %v669 = vor.u32 1.1754944e-38, %v668
    %v670 = vsel %vm667, %v669, %v665
    %v671 = vmul.f32 1.0, %v670
    %v672 = vtanh.pop %v652
    %v674 = vrot.slane %v607, 4
    %v676 = vmul.f32 %v671, %v674
    %678 = vrot.lane.b32.xlu0 %v672, 32
    %v679 = vpop.permute.xlu0 %678
    %v681 = vmul.f32 %v671, %v679
    %683 = vrot.lane.b32.xlu0 %v681, 32
    %v684 = vpop.permute.xlu0 %683
    %v686 = vadd.f32 %v676, %v684
    %v687 = vtanh.pop %v686
    %689 = vrot.lane.b32.xlu0 %v687, 32
    %v690 = vpop.permute.xlu0 %689
    %v692 = vmul.f32 %v671, %v690
    %694 = vrot.lane.b32.xlu0 %v692, 64
    %v695 = vpop.permute.xlu0 %694
    %vm697 = vcmask 259076
    %698 = vst.msk [vmem:[#allocation2 - $0x4] sm:$0x30] %vm697, %v695
    %699 = vrot.lane.b32.xlu0 %v692, 96
    %v700 = vpop.permute.xlu0 %699
    %vm702 = vcmask 523526
    %703 = vst.msk [vmem:[#allocation2 - $0x6] sm:$0xc0] %vm702, %v700
    // Predicated region
    $region18: #{bilstm_forward.1} parent=1 // pred_check
      _
    $region19: #{bilstm_forward.1} parent=1 // pred_check_branch
      %705 = sbr.rel (0) target = $region21
    $region20: #{bilstm_forward.1} parent=1 // pred_region
      %707 = vsyncadd [#allocation3], 0
      %s709 = sshll.u32 [#allocation2], 4
      %s710 = int_to_ptr.vmem [resolvable:$true] %s709
      %s711 = sshll.u32 %s4, 4
      %s712 = int_to_ptr.hbm [resolvable:$true] %s711
      %714 = dma.vmem_to_hbm [thread:$0]  %s710, 32, %s712, [#allocation3]
    $region21: #{bilstm_forward.1} parent=1 // pred_fallthru
      _
    // Predicated region
    $region22: #{bilstm_forward.1} parent=1 // pred_check
      _
    $region23: #{bilstm_forward.1} parent=1 // pred_check_branch
      %716 = sbr.rel (0) target = $region25
    $region24: #{bilstm_forward.1} parent=1 // pred_region
      %718 = dma.done [#allocation3], 32
    $region25: #{bilstm_forward.1} parent=1 // pred_fallthru
      _
    %719 = vsyncpa [#allocation3], 1

</llo_original>
